<compile_context>
chip_gen: v5e
topology: v5e:2x2
jax: 0.10.0
libtpu: 0.0.40
codegen_flags: <defaults>
</compile_context>

<pallas_src>
import jax
import jax.numpy as jnp
from jax.experimental import pallas as pl
from jax.experimental.pallas import tpu as pltpu


def _scale_kernel(scale_ref, bias_ref, out_ref):
    # scale_ref: (1,) f32 scalar in SMEM; bias_ref/out_ref: (2, proj_dim) f32 in VMEM.
    out_ref[...] = bias_ref[...] * scale_ref[0]


def independent_modal_role_encoding(rel_pos_bias: jax.Array,
                                    rel_pos_scale: jax.Array) -> jax.Array:
    """rel_pos_bias * rel_pos_scale as a single-block Pallas TPU kernel.

    rel_pos_bias : (2, proj_dim) float32
    rel_pos_scale: (1,) float32  (lands in SMEM, read as a scalar)
    """
    assert rel_pos_bias.ndim == 2 and rel_pos_bias.shape[0] == 2
    assert rel_pos_scale.shape == (1,)

    rows, proj_dim = rel_pos_bias.shape
    elem_bytes = rel_pos_bias.dtype.itemsize
    n_elems = rows * proj_dim

    # Advisory hint so XLA can schedule/hide this tiny custom call instead of
    # treating it as an opaque blocker on the critical path.
    cost = pl.CostEstimate(
        flops=n_elems,                                    # one mul per element
        bytes_accessed=2 * n_elems * elem_bytes + rel_pos_scale.dtype.itemsize,
        transcendentals=0,
    )

    return pl.pallas_call(
        _scale_kernel,
        out_shape=jax.ShapeDtypeStruct(rel_pos_bias.shape, rel_pos_bias.dtype),
        in_specs=[
            pl.BlockSpec(memory_space=pltpu.SMEM),   # (1,) scalar scale
            pl.BlockSpec(memory_space=pltpu.VMEM),   # full (2, proj_dim) tile
        ],
        out_specs=pl.BlockSpec(memory_space=pltpu.VMEM),
        cost_estimate=cost,
    )(rel_pos_scale, rel_pos_bias)


def _orthogonal_init(key, shape, dtype=jnp.float32):
    """Deterministic equivalent of torch.nn.init.orthogonal_ for rows <= cols."""
    rows, cols = shape
    a = jax.random.normal(key, (cols, rows), dtype=jnp.float32)
    q, r = jnp.linalg.qr(a)
    d = jnp.sign(jnp.diagonal(r))
    q = q * d[None, :]
    return q.T.astype(dtype)  # (rows, cols) with orthonormal rows


if __name__ == "__main__":
    proj_dim = 256  # module default; multiple of 128 -> lane-dense output
    key = jax.random.PRNGKey(0)

    # Deterministic parameter init (shapes from the module's __init__)
    rel_pos_bias = _orthogonal_init(key, (2, proj_dim))       # (2, proj_dim) f32
    rel_pos_scale = jnp.ones((1,), dtype=jnp.float32)         # (1,) f32

    out = independent_modal_role_encoding(rel_pos_bias, rel_pos_scale)
    out = jax.block_until_ready(out)

    # Reference check against plain JAX (the production/fused path).
    ref = rel_pos_bias * rel_pos_scale[0]
    assert out.shape == (2, proj_dim)
    assert out.dtype == rel_pos_bias.dtype
    assert jnp.allclose(out, ref, atol=1e-6), "mismatch vs reference"

    # Also check under jit with a non-trivial scale to exercise the SMEM read.
    scale2 = jnp.full((1,), 0.37, dtype=jnp.float32)
    out_jit = jax.block_until_ready(
        jax.jit(independent_modal_role_encoding)(rel_pos_bias, scale2))
    assert jnp.allclose(out_jit, rel_pos_bias * scale2[0], atol=1e-6), "jit path mismatch"

    print("KERNEL_OK")
</pallas_src>

<mosaic_0001>
module attributes {stable_mosaic.version = 11 : i64} {
  func.func @_scale_kernel(%arg0: memref<1xf32, #tpu.memory_space<smem>>, %arg1: memref<2x256xf32, #tpu.memory_space<vmem>>, %arg2: memref<2x256xf32, #tpu.memory_space<vmem>>) attributes {dimension_semantics = [], scalar_prefetch = 0 : i64, scratch_operands = 0 : i64, tpu.core_type = #tpu.core_type<tc>} {
    %c0 = arith.constant 0 : index
    %c0_0 = arith.constant 0 : index
    %0 = vector.load %arg1[%c0, %c0_0] : memref<2x256xf32, #tpu.memory_space<vmem>>, vector<2x256xf32>
    %c0_1 = arith.constant 0 : index
    %1 = memref.load %arg0[%c0_1] : memref<1xf32, #tpu.memory_space<smem>>
    %2 = vector.broadcast %1 : f32 to vector<2x256xf32>
    %3 = arith.mulf %0, %2 : vector<2x256xf32>
    %c0_2 = arith.constant 0 : index
    %c0_3 = arith.constant 0 : index
    %4 = vector.load %arg2[%c0_2, %c0_3] : memref<2x256xf32, #tpu.memory_space<vmem>>, vector<2x256xf32>
    tpu.vector_store %arg2[%c0_2, %c0_3], %3 {strides = array<i32>} : memref<2x256xf32, #tpu.memory_space<vmem>>, vector<2x256xf32>,
    return
  }
}

</mosaic_0001>

<llo_original>
// kernel: tpu_custom_call.1
$region0: #{tpu_custom_call.1}
  #allocation0 [shape = 'u32[]', space=smem, size = 0x4, offset = 0x4, fixed_abs, tag = 'smem constant byte address 0x4 - core index']
  #allocation1 [shape = 'u32[72,128]{1,0:T(1,128)}', space=vmem, size = 0x9000, scoped, tag = 'internal scratch']
  #allocation2 [shape = 'f32[1]{0:T(128)S(6)}', space=smem, size = 0x200, scoped, tag = 'scoped memory for tpu_custom_call.1']
  %s0 = inlined_call_operand.<no memory space> [shape: f32[1], index: 0, kind: input, shape index: {}]
  %s1 = inlined_call_operand.hbm [shape: f32[2,256], index: 1, kind: input, shape index: {}]
  %s2 = inlined_call_operand.hbm [shape: f32[2,256], index: 2, kind: output, shape index: {}]
  %s3 = sld [smem:[#allocation0]]
  $region22: #{tpu_custom_call.1} parent=0
    _
  %s5 = ssub.s32 1, %s3
  %s6 = scalar_select 0, %s5, %s3
  %7 = sst [smem:[#allocation2]] %s0
  $region1: #{tpu_custom_call.1} parent=0
    #allocation3 [shape = 'u8[2048]{0}', space=vmem, size = 0x800, scoped, tag = 'input window, operand 1, single buffered']
    #allocation4 [shape = 's32[1]{0}', space=sflag, size = 0x4, scoped, tag = 'scoped memory for tpu_custom_call.1']
    #allocation5 [shape = 's32[1]{0}', space=sflag, size = 0x4, scoped, tag = 'scoped memory for tpu_custom_call.1']
    #allocation6 [shape = 'u8[2048]{0}', space=vmem, size = 0x800, scoped, tag = 'output window, operand 0, single buffered']
    %8 = vsyncpa [#allocation4], 0
    %9 = vsyncpa [#allocation5], 0
    // Predicated region
    $region2: #{tpu_custom_call.1} parent=1 // pred_check
      _
    $region3: #{tpu_custom_call.1} parent=1 // pred_check_branch
      %11 = sbr.rel (0) target = $region5
    $region4: #{tpu_custom_call.1} parent=1 // pred_region
      _
    $region5: #{tpu_custom_call.1} parent=1 // pred_fallthru
      _
    // Predicated region
    $region6: #{tpu_custom_call.1} parent=1 // pred_check
      _
    $region7: #{tpu_custom_call.1} parent=1 // pred_check_branch
      %13 = sbr.rel (0) target = $region9
    $region8: #{tpu_custom_call.1} parent=1 // pred_region
      %15 = vsyncadd [#allocation4], 0
      %s17 = sshll.u32 %s1, 4
      %s18 = int_to_ptr.hbm [resolvable:$true] %s17
      %s19 = sshll.u32 [#allocation3], 4
      %s20 = int_to_ptr.vmem [resolvable:$true] %s19
      %22 = dma.hbm_to_vmem [thread:$0]  %s18, 64, %s20, [#allocation4]
    $region9: #{tpu_custom_call.1} parent=1 // pred_fallthru
      _
    // Predicated region
    $region10: #{tpu_custom_call.1} parent=1 // pred_check
      _
    $region11: #{tpu_custom_call.1} parent=1 // pred_check_branch
      %24 = sbr.rel (0) target = $region13
    $region12: #{tpu_custom_call.1} parent=1 // pred_region
      %26 = dma.done [#allocation4], 64
    $region13: #{tpu_custom_call.1} parent=1 // pred_fallthru
      _
    %v27 = vld [vmem:[#allocation3] sm:$0xf]
    %s28 = sld [smem:[#allocation2]]
    %v29 = vstv %s28
    %v30 = vmul.f32 %v27, %v29
    %31 = vst [vmem:[#allocation6] sm:$0xf] %v30
    // Predicated region
    $region14: #{tpu_custom_call.1} parent=1 // pred_check
      _
    $region15: #{tpu_custom_call.1} parent=1 // pred_check_branch
      %33 = sbr.rel (0) target = $region17
    $region16: #{tpu_custom_call.1} parent=1 // pred_region
      %35 = vsyncadd [#allocation5], 0
      %s37 = sshll.u32 [#allocation6], 4
      %s38 = int_to_ptr.vmem [resolvable:$true] %s37
      %s39 = sshll.u32 %s2, 4
      %s40 = int_to_ptr.hbm [resolvable:$true] %s39
      %42 = dma.vmem_to_hbm [thread:$0]  %s38, 64, %s40, [#allocation5]
    $region17: #{tpu_custom_call.1} parent=1 // pred_fallthru
      _
    // Predicated region
    $region18: #{tpu_custom_call.1} parent=1 // pred_check
      _
    $region19: #{tpu_custom_call.1} parent=1 // pred_check_branch
      %44 = sbr.rel (0) target = $region21
    $region20: #{tpu_custom_call.1} parent=1 // pred_region
      %46 = dma.done [#allocation5], 64
    $region21: #{tpu_custom_call.1} parent=1 // pred_fallthru
      _
    %47 = vsyncpa [#allocation4], 1
    %48 = vsyncpa [#allocation5], 1

</llo_original>
